<compile_context>
chip_gen: v5e
topology: v5e:2x2
jax: 0.10.0
libtpu: 0.0.40
codegen_flags: <defaults>
</compile_context>

<pallas_src>
import jax
import jax.numpy as jnp
from jax.experimental import pallas as pl
from jax.experimental.pallas import tpu as pltpu

EPSILON = 1e-07
LANES = 128
MAX_TILE_ROWS = 512  # 512x128 f32 tile = 256 KiB/input; fits every gen incl. v7x


def _precision_loss_kernel(d_ref, lbl_ref, out_ref, tp_acc, tot_acc):
    # d_ref:   (tile_rows, 128) f32,  d = logit0 - logit1  (p0 = sigmoid(d))
    # lbl_ref: (tile_rows, 128) i32,  labels in {0,1}, 2 = padding sentinel
    # out_ref: (1, 128) f32, every lane holds the scalar loss
    # tp_acc / tot_acc: (1, 128) f32 per-lane partial sums (persist over grid)
    pid = pl.program_id(0)

    @pl.when(pid == 0)
    def _init():
        tp_acc[...] = jnp.zeros_like(tp_acc)
        tot_acc[...] = jnp.zeros_like(tot_acc)

    d = d_ref[...]
    lbl = lbl_ref[...]

    # p0 = softmax(logits)[:, 0] = sigmoid(l0 - l1)
    p0 = 1.0 / (1.0 + jnp.exp(-d))

    zeros = jnp.zeros_like(p0)
    p0_valid = jnp.where(lbl != 2, p0, zeros)   # excludes padded tail
    p0_tp = jnp.where(lbl == 0, p0, zeros)      # true-positive mass for class 0

    # sublane (axis 0) reduction only; cross-lane reduce deferred to epilogue
    tp_acc[...] += jnp.sum(p0_tp, axis=0, keepdims=True)
    tot_acc[...] += jnp.sum(p0_valid, axis=0, keepdims=True)

    @pl.when(pid == pl.num_programs(0) - 1)
    def _finalize():
        tp = jnp.sum(tp_acc[...], keepdims=True)    # (1, 1)
        tot = jnp.sum(tot_acc[...], keepdims=True)  # (1, 1) == tp + fp
        precision = tp / (tot + EPSILON)
        precision = jnp.clip(precision, EPSILON, 1.0 - EPSILON)
        out_ref[...] = jnp.broadcast_to(1.0 - precision, (1, LANES))


def precision_loss(y_pred: jax.Array, y_true: jax.Array) -> jax.Array:
    """Equivalent of Precision_loss().forward(y_pred, y_true).

    y_pred: (N, 2) float logits
    y_true: (N,)   int labels in {0, 1}
    returns a scalar float32 loss.
    """
    assert y_pred.ndim == 2 and y_pred.shape[1] == 2
    assert y_true.ndim == 1
    n = y_pred.shape[0]

    yp = y_pred.astype(jnp.float32)
    d = yp[:, 0] - yp[:, 1]                 # (N,) ; p0 = sigmoid(d)
    lbl = y_true.astype(jnp.int32)          # (N,)

    rows = max(1, pl.cdiv(n, LANES))
    if rows > MAX_TILE_ROWS:
        rows = pl.cdiv(rows, MAX_TILE_ROWS) * MAX_TILE_ROWS
        tile_rows = MAX_TILE_ROWS
    else:
        tile_rows = rows                    # single block == full array dims
    num_tiles = rows // tile_rows

    pad = rows * LANES - n
    d_p = jnp.pad(d, (0, pad)).reshape(rows, LANES)
    lbl_p = jnp.pad(lbl, (0, pad), constant_values=2).reshape(rows, LANES)

    out = pl.pallas_call(
        _precision_loss_kernel,
        out_shape=jax.ShapeDtypeStruct((1, LANES), jnp.float32),
        grid_spec=pltpu.PrefetchScalarGridSpec(
            num_scalar_prefetch=0,
            grid=(num_tiles,),
            in_specs=[
                pl.BlockSpec((tile_rows, LANES), lambda i: (i, 0)),
                pl.BlockSpec((tile_rows, LANES), lambda i: (i, 0)),
            ],
            out_specs=pl.BlockSpec((1, LANES), lambda i: (0, 0)),
            scratch_shapes=[
                pltpu.VMEM((1, LANES), jnp.float32),
                pltpu.VMEM((1, LANES), jnp.float32),
            ],
        ),
        compiler_params=pltpu.CompilerParams(
            dimension_semantics=("arbitrary",)),
    )(d_p, lbl_p)

    # PyTorch returns 1 - precision[0].mean(); precision[0] is a scalar.
    return out[0, 0]


def _reference(y_pred, y_true):
    y_true_oh = jax.nn.one_hot(y_true, 2, dtype=jnp.float32)
    p = jax.nn.softmax(y_pred.astype(jnp.float32), axis=1)
    tp = jnp.sum(y_true_oh * p, axis=0)
    fp = jnp.sum((1.0 - y_true_oh) * p, axis=0)
    prec = tp / (tp + fp + EPSILON)
    prec = jnp.clip(prec, EPSILON, 1.0 - EPSILON)
    return 1.0 - prec[0]


if __name__ == "__main__":
    key = jax.random.PRNGKey(0)
    k1, k2 = jax.random.split(key)

    # small shape consistent with the module: (N, 2) logits, (N,) labels
    N = 16
    y_pred = jax.random.normal(k1, (N, 2), dtype=jnp.float32)
    y_true = jax.random.randint(k2, (N,), 0, 2, dtype=jnp.int32)

    loss = jax.block_until_ready(precision_loss(y_pred, y_true))
    ref = _reference(y_pred, y_true)
    assert jnp.allclose(loss, ref, atol=1e-5, rtol=1e-5), (loss, ref)

    # also exercise the padded, multi-tile grid path (2 tiles of 512x128)
    k3, k4 = jax.random.split(k2)
    N2 = 70_000
    y_pred2 = jax.random.normal(k3, (N2, 2), dtype=jnp.float32)
    y_true2 = jax.random.randint(k4, (N2,), 0, 2, dtype=jnp.int32)
    loss2 = jax.block_until_ready(precision_loss(y_pred2, y_true2))
    ref2 = _reference(y_pred2, y_true2)
    assert jnp.allclose(loss2, ref2, atol=1e-4, rtol=1e-4), (loss2, ref2)

    print("KERNEL_OK")
</pallas_src>

<mosaic_0001>
module attributes {stable_mosaic.version = 11 : i64} {
  func.func @_precision_loss_kernel(%arg0: i32, %arg1: memref<1x128xf32, #tpu.memory_space<vmem>>, %arg2: memref<1x128xi32, #tpu.memory_space<vmem>>, %arg3: memref<1x128xf32, #tpu.memory_space<vmem>>, %arg4: memref<1x128xf32, #tpu.memory_space<vmem>>, %arg5: memref<1x128xf32, #tpu.memory_space<vmem>>) attributes {dimension_semantics = [#tpu.dimension_semantics<arbitrary>], iteration_bounds = array<i64: 1>, scalar_prefetch = 0 : i64, scratch_operands = 2 : i64, tpu.core_type = #tpu.core_type<tc>, window_params = [{transform_indices = @transform_0, window_bounds = array<i64: 1, 128>}, {transform_indices = @transform_1, window_bounds = array<i64: 1, 128>}, {pipeline_mode = #tpu.pipeline_mode<synchronous>, transform_indices = @transform_2, window_bounds = array<i64: 1, 128>}]} {
    %c0_i32 = arith.constant 0 : i32
    %0 = arith.cmpi eq, %arg0, %c0_i32 : i32
    %1 = arith.extui %0 : i1 to i32
    %c0_i32_0 = arith.constant 0 : i32
    %2 = arith.cmpi ne, %1, %c0_i32_0 : i32
    scf.if %2 {
      %cst_20 = arith.constant 0.000000e+00 : f32
      %32 = vector.broadcast %cst_20 : f32 to vector<1x128xf32>
      %c0_21 = arith.constant 0 : index
      %c0_22 = arith.constant 0 : index
      %33 = vector.load %arg4[%c0_21, %c0_22] : memref<1x128xf32, #tpu.memory_space<vmem>>, vector<1x128xf32>
      tpu.vector_store %arg4[%c0_21, %c0_22], %32 {strides = array<i32>} : memref<1x128xf32, #tpu.memory_space<vmem>>, vector<1x128xf32>,
      %cst_23 = arith.constant 0.000000e+00 : f32
      %34 = vector.broadcast %cst_23 : f32 to vector<1x128xf32>
      %c0_24 = arith.constant 0 : index
      %c0_25 = arith.constant 0 : index
      %35 = vector.load %arg5[%c0_24, %c0_25] : memref<1x128xf32, #tpu.memory_space<vmem>>, vector<1x128xf32>
      tpu.vector_store %arg5[%c0_24, %c0_25], %34 {strides = array<i32>} : memref<1x128xf32, #tpu.memory_space<vmem>>, vector<1x128xf32>,
    } else {
    }
    %c0 = arith.constant 0 : index
    %c0_1 = arith.constant 0 : index
    %3 = vector.load %arg1[%c0, %c0_1] : memref<1x128xf32, #tpu.memory_space<vmem>>, vector<1x128xf32>
    %c0_2 = arith.constant 0 : index
    %c0_3 = arith.constant 0 : index
    %4 = vector.load %arg2[%c0_2, %c0_3] : memref<1x128xi32, #tpu.memory_space<vmem>>, vector<1x128xi32>
    %cst = arith.constant 0.000000e+00 : f32
    %5 = vector.broadcast %cst : f32 to vector<1x128xf32>
    %6 = arith.subf %5, %3 : vector<1x128xf32>
    %7 = math.exp %6 : vector<1x128xf32>
    %cst_4 = arith.constant 1.000000e+00 : f32
    %8 = vector.broadcast %cst_4 : f32 to vector<1x128xf32>
    %9 = arith.addf %8, %7 : vector<1x128xf32>
    %cst_5 = arith.constant 1.000000e+00 : f32
    %10 = vector.broadcast %cst_5 : f32 to vector<1x128xf32>
    %11 = arith.divf %10, %9 : vector<1x128xf32>
    %cst_6 = arith.constant 0.000000e+00 : f32
    %12 = vector.broadcast %cst_6 : f32 to vector<1x128xf32>
    %c2_i32 = arith.constant 2 : i32
    %13 = vector.broadcast %c2_i32 : i32 to vector<1x128xi32>
    %14 = arith.cmpi ne, %4, %13 : vector<1x128xi32>
    %15 = arith.select %14, %11, %12 : vector<1x128xi1>, vector<1x128xf32>
    %c0_i32_7 = arith.constant 0 : i32
    %16 = vector.broadcast %c0_i32_7 : i32 to vector<1x128xi32>
    %17 = arith.cmpi eq, %4, %16 : vector<1x128xi32>
    %18 = arith.select %17, %11, %12 : vector<1x128xi1>, vector<1x128xf32>
    %c0_8 = arith.constant 0 : index
    %c0_9 = arith.constant 0 : index
    %19 = vector.load %arg4[%c0_8, %c0_9] : memref<1x128xf32, #tpu.memory_space<vmem>>, vector<1x128xf32>
    %cst_10 = arith.constant dense<0.000000e+00> : vector<128xf32>
    %20 = vector.multi_reduction <add>, %18, %cst_10 [0] : vector<1x128xf32> to vector<128xf32>
    %21 = vector.shape_cast %20 : vector<128xf32> to vector<1x128xf32>
    %22 = arith.addf %19, %21 : vector<1x128xf32>
    %c0_11 = arith.constant 0 : index
    %c0_12 = arith.constant 0 : index
    %23 = vector.load %arg4[%c0_11, %c0_12] : memref<1x128xf32, #tpu.memory_space<vmem>>, vector<1x128xf32>
    tpu.vector_store %arg4[%c0_11, %c0_12], %22 {strides = array<i32>} : memref<1x128xf32, #tpu.memory_space<vmem>>, vector<1x128xf32>,
    %c0_13 = arith.constant 0 : index
    %c0_14 = arith.constant 0 : index
    %24 = vector.load %arg5[%c0_13, %c0_14] : memref<1x128xf32, #tpu.memory_space<vmem>>, vector<1x128xf32>
    %cst_15 = arith.constant dense<0.000000e+00> : vector<128xf32>
    %25 = vector.multi_reduction <add>, %15, %cst_15 [0] : vector<1x128xf32> to vector<128xf32>
    %26 = vector.shape_cast %25 : vector<128xf32> to vector<1x128xf32>
    %27 = arith.addf %24, %26 : vector<1x128xf32>
    %c0_16 = arith.constant 0 : index
    %c0_17 = arith.constant 0 : index
    %28 = vector.load %arg5[%c0_16, %c0_17] : memref<1x128xf32, #tpu.memory_space<vmem>>, vector<1x128xf32>
    tpu.vector_store %arg5[%c0_16, %c0_17], %27 {strides = array<i32>} : memref<1x128xf32, #tpu.memory_space<vmem>>, vector<1x128xf32>,
    %c0_i32_18 = arith.constant 0 : i32
    %29 = arith.cmpi eq, %arg0, %c0_i32_18 : i32
    %30 = arith.extui %29 : i1 to i32
    %c0_i32_19 = arith.constant 0 : i32
    %31 = arith.cmpi ne, %30, %c0_i32_19 : i32
    scf.if %31 {
      %c0_20 = arith.constant 0 : index
      %c0_21 = arith.constant 0 : index
      %32 = vector.load %arg4[%c0_20, %c0_21] : memref<1x128xf32, #tpu.memory_space<vmem>>, vector<1x128xf32>
      %33 = vector.shape_cast %32 : vector<1x128xf32> to vector<1x1x128xf32>
      %cst_22 = arith.constant dense<0.000000e+00> : vector<1xf32>
      %34 = vector.multi_reduction <add>, %33, %cst_22 [1, 2] : vector<1x1x128xf32> to vector<1xf32>
      %35 = vector.shape_cast %34 : vector<1xf32> to vector<1x1x1xf32>
      %36 = vector.extract %35[0, 0, 0] : f32 from vector<1x1x1xf32>
      %37 = vector.broadcast %36 : f32 to vector<1x1xf32>
      %c0_23 = arith.constant 0 : index
      %c0_24 = arith.constant 0 : index
      %38 = vector.load %arg5[%c0_23, %c0_24] : memref<1x128xf32, #tpu.memory_space<vmem>>, vector<1x128xf32>
      %39 = vector.shape_cast %38 : vector<1x128xf32> to vector<1x1x128xf32>
      %cst_25 = arith.constant dense<0.000000e+00> : vector<1xf32>
      %40 = vector.multi_reduction <add>, %39, %cst_25 [1, 2] : vector<1x1x128xf32> to vector<1xf32>
      %41 = vector.shape_cast %40 : vector<1xf32> to vector<1x1x1xf32>
      %42 = vector.extract %41[0, 0, 0] : f32 from vector<1x1x1xf32>
      %43 = vector.broadcast %42 : f32 to vector<1x1xf32>
      %cst_26 = arith.constant 1.000000e-07 : f32
      %44 = vector.broadcast %cst_26 : f32 to vector<1x1xf32>
      %45 = arith.addf %43, %44 : vector<1x1xf32>
      %46 = arith.divf %37, %45 : vector<1x1xf32>
      %cst_27 = arith.constant 1.000000e-07 : f32
      %cst_28 = arith.constant 0.99999988 : f32
      %47 = vector.broadcast %cst_27 : f32 to vector<1x1xf32>
      %48 = arith.maximumf %47, %46 : vector<1x1xf32>
      %49 = vector.broadcast %cst_28 : f32 to vector<1x1xf32>
      %50 = arith.minimumf %49, %48 : vector<1x1xf32>
      %cst_29 = arith.constant 1.000000e+00 : f32
      %51 = vector.broadcast %cst_29 : f32 to vector<1x1xf32>
      %52 = arith.subf %51, %50 : vector<1x1xf32>
      %53 = vector.shape_cast %52 : vector<1x1xf32> to vector<1x1xf32>
      %54 = vector.broadcast %53 : vector<1x1xf32> to vector<1x128xf32>
      %c0_30 = arith.constant 0 : index
      %c0_31 = arith.constant 0 : index
      %55 = vector.load %arg3[%c0_30, %c0_31] : memref<1x128xf32, #tpu.memory_space<vmem>>, vector<1x128xf32>
      tpu.vector_store %arg3[%c0_30, %c0_31], %54 {strides = array<i32>} : memref<1x128xf32, #tpu.memory_space<vmem>>, vector<1x128xf32>,
    } else {
    }
    return
  }
  func.func @transform_0(%arg0: i32) -> (i32, i32) {
    %c0_i32 = arith.constant 0 : i32
    %c0_i32_0 = arith.constant 0 : i32
    return %arg0, %c0_i32 : i32, i32
  }
  func.func @transform_1(%arg0: i32) -> (i32, i32) {
    %c0_i32 = arith.constant 0 : i32
    %c0_i32_0 = arith.constant 0 : i32
    return %arg0, %c0_i32 : i32, i32
  }
  func.func @transform_2(%arg0: i32) -> (i32, i32) {
    %c0_i32 = arith.constant 0 : i32
    %c0_i32_0 = arith.constant 0 : i32
    %c0_i32_1 = arith.constant 0 : i32
    return %c0_i32, %c0_i32_0 : i32, i32
  }
}

</mosaic_0001>

<llo_original>
// kernel: tpu_custom_call.1
$region0: #{tpu_custom_call.1}
  #allocation0 [shape = 'u32[]', space=smem, size = 0x4, offset = 0x4, fixed_abs, tag = 'smem constant byte address 0x4 - core index']
  #allocation1 [shape = 'u32[72,128]{1,0:T(1,128)}', space=vmem, size = 0x9000, scoped, tag = 'internal scratch']
  #allocation2 [shape = 'f32[1,128]{1,0:T(1,128)}', space=vmem, size = 0x200, scoped, tag = 'scratch operand']
  #allocation3 [shape = 'f32[1,128]{1,0:T(1,128)}', space=vmem, size = 0x200, scoped, tag = 'scratch operand']
  %s0 = inlined_call_operand.hbm [shape: f32[1,128], index: 0, kind: input, shape index: {}]
  %s1 = inlined_call_operand.hbm [shape: s32[1,128], index: 1, kind: input, shape index: {}]
  %s2 = inlined_call_operand.hbm [shape: f32[1,128], index: 2, kind: output, shape index: {}]
  %s3 = sld [smem:[#allocation0]]
  $region34: #{tpu_custom_call.1} parent=0
    _
  %s5 = ssub.s32 1, %s3
  %s6 = scalar_select 0, %s5, %s3
  $region1: #{tpu_custom_call.1} parent=0
    #allocation4 [shape = 'u8[512]{0}', space=vmem, size = 0x400, scoped, tag = 'input window, operand 0, single buffered']
    #allocation5 [shape = 's32[1]{0}', space=sflag, size = 0x4, scoped, tag = 'scoped memory for tpu_custom_call.1']
    #allocation6 [shape = 's32[1]{0}', space=sflag, size = 0x4, scoped, tag = 'scoped memory for tpu_custom_call.1']
    #allocation7 [shape = 'u8[512]{0}', space=vmem, size = 0x400, scoped, tag = 'input window, operand 1, single buffered']
    #allocation8 [shape = 's32[1]{0}', space=sflag, size = 0x4, scoped, tag = 'scoped memory for tpu_custom_call.1']
    #allocation9 [shape = 'u8[512]{0}', space=vmem, size = 0x400, scoped, tag = 'output window, operand 0, single buffered']
    %7 = vsyncpa [#allocation5], 0
    %8 = vsyncpa [#allocation8], 0
    %9 = vsyncpa [#allocation6], 0
    // Predicated region
    $region2: #{tpu_custom_call.1} parent=1 // pred_check
      _
    $region3: #{tpu_custom_call.1} parent=1 // pred_check_branch
      %11 = sbr.rel (0) target = $region5
    $region4: #{tpu_custom_call.1} parent=1 // pred_region
      %13 = vsyncadd [#allocation5], 0
      %s15 = sshll.u32 %s0, 4
      %s16 = int_to_ptr.hbm [resolvable:$true] %s15
      %s17 = sshll.u32 [#allocation4], 4
      %s18 = int_to_ptr.vmem [resolvable:$true] %s17
      %20 = dma.hbm_to_vmem [thread:$0]  %s16, 16, %s18, [#allocation5]
    $region5: #{tpu_custom_call.1} parent=1 // pred_fallthru
      _
    // Predicated region
    $region6: #{tpu_custom_call.1} parent=1 // pred_check
      _
    $region7: #{tpu_custom_call.1} parent=1 // pred_check_branch
      %22 = sbr.rel (0) target = $region9
    $region8: #{tpu_custom_call.1} parent=1 // pred_region
      %24 = vsyncadd [#allocation8], 0
      %s26 = sshll.u32 %s1, 4
      %s27 = int_to_ptr.hbm [resolvable:$true] %s26
      %s28 = sshll.u32 [#allocation7], 4
      %s29 = int_to_ptr.vmem [resolvable:$true] %s28
      %31 = dma.hbm_to_vmem [thread:$0]  %s27, 16, %s29, [#allocation8]
    $region9: #{tpu_custom_call.1} parent=1 // pred_fallthru
      _
    // Predicated region
    $region10: #{tpu_custom_call.1} parent=1 // pred_check
      _
    $region11: #{tpu_custom_call.1} parent=1 // pred_check_branch
      %33 = sbr.rel (0) target = $region13
    $region12: #{tpu_custom_call.1} parent=1 // pred_region
      %35 = dma.done [#allocation5], 16
    $region13: #{tpu_custom_call.1} parent=1 // pred_fallthru
      _
    // Predicated region
    $region14: #{tpu_custom_call.1} parent=1 // pred_check
      _
    $region15: #{tpu_custom_call.1} parent=1 // pred_check_branch
      %37 = sbr.rel (0) target = $region17
    $region16: #{tpu_custom_call.1} parent=1 // pred_region
      %39 = dma.done [#allocation8], 16
    $region17: #{tpu_custom_call.1} parent=1 // pred_fallthru
      _
    %p40 = scmp.eq.s32.totalorder 0, 0
    // Predicated region
    $region18: #{tpu_custom_call.1} parent=1 // pred_check
      %p41 = pneg %p40
    $region19: #{tpu_custom_call.1} parent=1 // pred_check_branch
      %43 = sbr.rel (%p41) target = $region21
    $region20: #{tpu_custom_call.1} parent=1 // pred_region
      %44 = vst [vmem:[#allocation2] sm:$0x1] 0.0
      %45 = vst [vmem:[#allocation3] sm:$0x1] 0.0
    $region21: #{tpu_custom_call.1} parent=1 // pred_fallthru
      _
    %v46 = vld [vmem:[#allocation4] sm:$0x1]
    %v47 = vld [vmem:[#allocation7] sm:$0x1]
    %v48 = vsub.f32 0.0, %v46
    %v49 = vmul.f32 %v48, 1.442695
    %v50 = vpow.pop %v49
    %v51 = vadd.f32 %v50, 1.0
    %v52 = vrcp.pop %v51
    %v53 = vmul.f32 %v51, %v52
    %v54 = vsub.f32 1.0, %v53
    %v55 = vmul.f32 %v52, %v54
    %v56 = vadd.f32 %v52, %v55
    %vm57 = vweird.f32 %v51
    %vm58 = vweird.f32 %v52
    %vm59 = vmor %vm57, %vm58
    %v60 = vsel %vm59, %v52, %v56
    %v61 = vand.u32 2147483647, %v51
    %vm62 = vcmp.eq.f32.partialorder %v61, 8.507059e+37
    %v63 = vand.u32 %v51, 2147483648
    %v64 = vor.u32 1.1754944e-38, %v63
    %v65 = vsel %vm62, %v64, %v60
    %v66 = vmul.f32 1.0, %v65
    %vm67 = vcmp.ne.s32.totalorder %v47, 2
    %v68 = vsel %vm67, %v66, 0.0
    %vm69 = vcmp.eq.s32.totalorder %v47, 0
    %v70 = vsel %vm69, %v66, 0.0
    %v71 = vld [vmem:[#allocation2] sm:$0x1]
    %v72 = vadd.f32 %v70, 0.0
    %v73 = vadd.f32 %v71, %v72
    %74 = vst [vmem:[#allocation2] sm:$0x1] %v73
    %v75 = vld [vmem:[#allocation3] sm:$0x1]
    %v76 = vadd.f32 %v68, 0.0
    %v77 = vadd.f32 %v75, %v76
    %78 = vst [vmem:[#allocation3] sm:$0x1] %v77
    // Predicated region
    $region22: #{tpu_custom_call.1} parent=1 // pred_check
      %p79 = pneg %p40
    $region23: #{tpu_custom_call.1} parent=1 // pred_check_branch
      %81 = sbr.rel (%p79) target = $region25
    $region24: #{tpu_custom_call.1} parent=1 // pred_region
      %v82 = vld [vmem:[#allocation2] sm:$0x1]
      %vm83 = vcmask 1040384
      %v84 = vsel %vm83, %v82, 0.0
      %85 = vadd.xlane.f32.xlu0 %v84
      %v86 = vpop.xlane.xlu0 %85
      %v87 = vrot.slane %v86, 4
      %v88 = vadd.f32 %v86, %v87
      %v89 = vrot.slane %v88, 2
      %v90 = vadd.f32 %v88, %v89
      %v91 = vrot.slane %v90, 1
      %v92 = vadd.f32 %v90, %v91
      %s93 = vtos %v92
      %v94 = vstv %s93
      %v95 = vld [vmem:[#allocation3] sm:$0x1]
      %v96 = vsel %vm83, %v95, 0.0
      %97 = vadd.xlane.f32.xlu0 %v96
      %v98 = vpop.xlane.xlu0 %97
      %v99 = vrot.slane %v98, 4
      %v100 = vadd.f32 %v98, %v99
      %v101 = vrot.slane %v100, 2
      %v102 = vadd.f32 %v100, %v101
      %v103 = vrot.slane %v102, 1
      %v104 = vadd.f32 %v102, %v103
      %s105 = vtos %v104
      %v106 = vstv %s105
      %v107 = vadd.f32 %v106, 1e-07
      %v108 = vrcp.pop %v107
      %v109 = vmul.f32 %v107, %v108
      %v110 = vsub.f32 1.0, %v109
      %v111 = vmul.f32 %v108, %v110
      %v112 = vadd.f32 %v108, %v111
      %vm113 = vweird.f32 %v107
      %vm114 = vweird.f32 %v108
      %vm115 = vmor %vm113, %vm114
      %v116 = vsel %vm115, %v108, %v112
      %v117 = vand.u32 2147483647, %v107
      %vm118 = vcmp.eq.f32.partialorder %v117, 8.507059e+37
      %v119 = vand.u32 %v107, 2147483648
      %v120 = vor.u32 1.1754944e-38, %v119
      %v121 = vsel %vm118, %v120, %v116
      %v122 = vmul.f32 %v94, %v121
      %v123 = vmax.f32 %v122, 1e-07
      %v124 = vmin.f32 %v123, 0.9999999
      %v125 = vsub.f32 1.0, %v124
      %126 = vst [vmem:[#allocation9] sm:$0x1] %v125
    $region25: #{tpu_custom_call.1} parent=1 // pred_fallthru
      _
    // Predicated region
    $region26: #{tpu_custom_call.1} parent=1 // pred_check
      _
    $region27: #{tpu_custom_call.1} parent=1 // pred_check_branch
      %128 = sbr.rel (0) target = $region29
    $region28: #{tpu_custom_call.1} parent=1 // pred_region
      %130 = vsyncadd [#allocation6], 0
      %s132 = sshll.u32 [#allocation9], 4
      %s133 = int_to_ptr.vmem [resolvable:$true] %s132
      %s134 = sshll.u32 %s2, 4
      %s135 = int_to_ptr.hbm [resolvable:$true] %s134
      %137 = dma.vmem_to_hbm [thread:$0]  %s133, 16, %s135, [#allocation6]
    $region29: #{tpu_custom_call.1} parent=1 // pred_fallthru
      _
    // Predicated region
    $region30: #{tpu_custom_call.1} parent=1 // pred_check
      _
    $region31: #{tpu_custom_call.1} parent=1 // pred_check_branch
      %139 = sbr.rel (0) target = $region33
    $region32: #{tpu_custom_call.1} parent=1 // pred_region
      %141 = dma.done [#allocation6], 16
    $region33: #{tpu_custom_call.1} parent=1 // pred_fallthru
      _
    %142 = vsyncpa [#allocation5], 1
    %143 = vsyncpa [#allocation8], 1
    %144 = vsyncpa [#allocation6], 1

</llo_original>
